<compile_context>
chip_gen: v6e
topology: v6e:2x2x1
jax: 0.10.0
libtpu: 0.0.40
codegen_flags: <defaults>
</compile_context>

<pallas_src>
import functools

import jax
import jax.numpy as jnp
from jax import lax
from jax.experimental import pallas as pl
from jax.experimental.pallas import tpu as pltpu

LANE = 128


def _row_partial_sums(x, sr):
    """(sr, LANE) f32 -> (8, LANE) partial row sums.

    For sr % 8 == 0 this is pure vreg-wise VPU adds (no XLU).  The tiny-spatial
    fallback (sr < 8 or ragged full-dim block) does one sublane reduce and
    places it in sublane 0 of an (8, LANE) slab.
    """
    if sr % 8 == 0:
        return jnp.sum(x.reshape(sr // 8, 8, LANE), axis=0)
    s = jnp.sum(x, axis=0, keepdims=True)                     # (1, LANE)
    row = lax.broadcasted_iota(jnp.int32, (8, LANE), 0)
    return jnp.where(row == 0, jnp.broadcast_to(s, (8, LANE)), 0.0)


def _make_dice_kernel(n_classes, tr, sr, hwr, nk, n_super, has_tail,
                      fuse_softmax):
    """Kernel for static (n_classes, tr, sr, hwr, nk, n_super, tail, softmax).

    Grid = (N, n_super, nk).
      score_ref : (1, C, tr, LANE)  native float dtype (f32/bf16/f16)
      label_ref : (1, tr, LANE)     native int dtype (i8/u8/i16/i32)
      out_ref   : (1, 1, 3*C, 8, LANE) f32 resident accumulator across k;
                  stat layout per class c: [3c]=intersect, [3c+1]=z_sum,
                  [3c+2]=y_sum.
    """
    C = n_classes
    n_sub = tr // sr

    def kernel(score_ref, label_ref, out_ref):
        p = pl.program_id(1)
        k = pl.program_id(2)

        @pl.when(k == 0)
        def _init():
            out_ref[...] = jnp.zeros_like(out_ref)

        def slab_stats(r0, masked, base):
            # Load one row sub-slab, widen to f32 in-register.
            lab = label_ref[0, pl.ds(r0, sr), :].astype(jnp.int32)
            s_list = [score_ref[0, c, pl.ds(r0, sr), :].astype(jnp.float32)
                      for c in range(C)]
            if fuse_softmax:
                m = s_list[0]
                for c in range(1, C):
                    m = jnp.maximum(m, s_list[c])
                e_list = [jnp.exp(s - m) for s in s_list]
                denom = e_list[0]
                for c in range(1, C):
                    denom = denom + e_list[c]
                inv = pl.reciprocal(denom, approx=True)       # EUP slot
                s_list = [e * inv for e in e_list]
            if masked:
                # Only the single ragged tail block ever runs this path.
                rows = (lax.broadcasted_iota(jnp.int32, (sr, LANE), 0)
                        + base + r0)
                valid = rows < hwr
                lab = jnp.where(valid, lab, -1)               # nan-safe select
                s_list = [jnp.where(valid, s, 0.0) for s in s_list]
            parts = []
            for c in range(C):
                sc = s_list[c]
                tc = (lab == c).astype(jnp.float32)           # one-hot class c
                parts.append(_row_partial_sums(sc * tc, sr))  # intersect
                parts.append(_row_partial_sums(sc * sc, sr))  # z_sum
                parts.append(_row_partial_sums(tc, sr))       # y_sum (t*t==t)
            return tuple(parts)

        def accumulate(masked, base):
            if n_sub <= 8:
                accs = slab_stats(0, masked, base)
                for i in range(1, n_sub):
                    part = slab_stats(i * sr, masked, base)
                    accs = tuple(a + b for a, b in zip(accs, part))
            else:
                def body(i, carry):
                    r0 = pl.multiple_of(i * sr, 8)
                    part = slab_stats(r0, masked, base)
                    return tuple(a + b for a, b in zip(carry, part))
                init = tuple(jnp.zeros((8, LANE), jnp.float32)
                             for _ in range(3 * C))
                accs = lax.fori_loop(0, n_sub, body, init)
            # One (8, LANE) RMW per class/stat per grid step.
            for idx in range(3 * C):
                out_ref[0, 0, idx] += accs[idx]

        if has_tail:
            base = (p * nk + k) * tr
            is_tail = jnp.logical_and(p == n_super - 1, k == nk - 1)

            @pl.when(jnp.logical_not(is_tail))
            def _full():
                accumulate(False, base)

            @pl.when(is_tail)
            def _tail():
                accumulate(True, base)
        else:
            accumulate(False, 0)

    return kernel


@functools.partial(jax.jit,
                   static_argnames=("n_classes", "softmax",
                                    "max_rows_per_step"))
def dice_loss(inputs, target, weight=None, n_classes=2, softmax=False,
              max_rows_per_step=None):
    """Matches DiceLoss.forward(inputs, target, weight, softmax).

    max_rows_per_step is a test-only knob that caps the per-grid-step tile so
    the multi-chunk / tail / super-chunk paths can be exercised at small sizes.
    """
    N, C, H, W = inputs.shape
    assert C == n_classes, "channel dim must equal n_classes"
    HW = H * W
    fuse_softmax = bool(softmax)

    # Labels: keep native integer storage; bools become int8.
    if target.dtype == jnp.bool_:
        labels = target.astype(jnp.int8)
    elif jnp.issubdtype(target.dtype, jnp.integer):
        labels = target
    else:
        labels = target.astype(jnp.int32)

    if HW % LANE == 0:
        # Common case: zero-copy reshapes (NCHW / NHW are contiguous).
        hwr = HW // LANE
        # Keep narrow score storage only when rows sit on packed-tile bounds.
        if inputs.dtype in (jnp.bfloat16, jnp.float16):
            if hwr % 16 != 0:
                inputs = inputs.astype(jnp.float32)
        elif inputs.dtype != jnp.float32:
            inputs = inputs.astype(jnp.float32)
        l_isz = labels.dtype.itemsize
        if ((l_isz == 1 and hwr % 32 != 0)
                or (l_isz == 2 and hwr % 16 != 0) or l_isz > 4):
            labels = labels.astype(jnp.int32)
        score = inputs.reshape(N, C, hwr, LANE)
        labels = labels.reshape(N, hwr, LANE)
    else:
        # Rare fallback (H*W not a multiple of 128): pad the flattened spatial
        # axis once; softmax is applied in the wrapper so zero padding stays
        # inert (pad labels with -1 -> never matches a class).
        if fuse_softmax:
            inputs = jax.nn.softmax(inputs.astype(jnp.float32), axis=1)
            fuse_softmax = False
        inputs = inputs.astype(jnp.float32)
        labels = labels.astype(jnp.int32)
        hwp = ((HW + LANE - 1) // LANE) * LANE
        hwr = hwp // LANE
        score = jnp.pad(inputs.reshape(N, C, HW),
                        ((0, 0), (0, 0), (0, hwp - HW))).reshape(N, C, hwr,
                                                                 LANE)
        labels = jnp.pad(labels.reshape(N, HW), ((0, 0), (0, hwp - HW)),
                         constant_values=-1).reshape(N, hwr, LANE)

    s_isz = score.dtype.itemsize
    l_isz = labels.dtype.itemsize
    align_of = {1: 32, 2: 16, 4: 8}
    row_align = max(align_of[s_isz], align_of[l_isz])

    # Tile rows per grid step: big tiles to amortize per-step overhead, kept
    # within ~12 MiB of double-buffered input traffic (scores + labels).
    bytes_per_row = LANE * (C * s_isz + l_isz)
    budget = 12 * 1024 * 1024
    cap = budget // (2 * bytes_per_row)
    if max_rows_per_step is not None:
        cap = min(cap, int(max_rows_per_step))
    cap = min(cap, 8192)
    cap = max(row_align, (cap // row_align) * row_align)

    if hwr <= cap:
        tr, has_tail = hwr, False
    else:
        tr = None
        t = cap
        while t >= row_align:
            if hwr % t == 0:
                tr = t
                break
            t -= row_align
        if tr is None:
            tr, has_tail = cap, True       # ragged tail handled in-kernel
        else:
            has_tail = False

    total_chunks = -(-hwr // tr)
    # v7x: guarantee a >=2-wide parallel axis even when N is 1 / odd.
    n_super = 2 if (total_chunks >= 2 and total_chunks % 2 == 0
                    and N % 2 == 1) else 1
    nk = total_chunks // n_super

    # Row sub-slab size: keep per-slab temporaries (softmax, products) in
    # vregs; must divide tr.
    sr_target = max(32, min(256, ((384 // (C + 3)) // 8) * 8))
    if tr % 8 == 0:
        sr = 8
        t = (min(tr, sr_target) // 8) * 8
        while t >= 8:
            if tr % t == 0:
                sr = t
                break
            t -= 8
    else:
        sr = tr                            # tiny / ragged full-dim block

    kernel = _make_dice_kernel(C, tr, sr, hwr, nk, n_super, has_tail,
                               fuse_softmax)

    sums = pl.pallas_call(
        kernel,
        out_shape=jax.ShapeDtypeStruct((N, n_super, 3 * C, 8, LANE),
                                       jnp.float32),
        grid_spec=pltpu.PrefetchScalarGridSpec(
            num_scalar_prefetch=0,
            grid=(N, n_super, nk),
            in_specs=[
                pl.BlockSpec((1, C, tr, LANE),
                             lambda n, p, k: (n, 0, p * nk + k, 0)),
                pl.BlockSpec((1, tr, LANE),
                             lambda n, p, k: (n, p * nk + k, 0)),
            ],
            out_specs=pl.BlockSpec((1, 1, 3 * C, 8, LANE),
                                   lambda n, p, k: (n, p, 0, 0, 0)),
        ),
        compiler_params=pltpu.CompilerParams(
            dimension_semantics=("parallel", "parallel", "arbitrary"),
            vmem_limit_bytes=32 * 1024 * 1024),
    )(score, labels)

    # (N, n_super, 3C, 8, LANE) -> (C, 3): [intersect, z_sum, y_sum]
    per_stat = jnp.sum(sums, axis=(0, 1, 3, 4)).reshape(C, 3)
    intersect = per_stat[:, 0]
    z_sum = per_stat[:, 1]
    y_sum = per_stat[:, 2]

    smooth = 1e-5
    dice = 1.0 - (2.0 * intersect + smooth) / (z_sum + y_sum + smooth)

    if weight is None:
        w = jnp.ones((n_classes,), jnp.float32)
    else:
        w = jnp.asarray(weight, jnp.float32)

    # TODO(synk): the PyTorch module also builds `class_wise_dice` via .item()
    # (host-side bookkeeping, unused in the returned loss); not reproduced.
    return jnp.sum(dice * w) / n_classes


def _dice_loss_ref(inputs, target, n_classes=2):
    """Pure-JAX reference mirroring the PyTorch module."""
    smooth = 1e-5
    loss = 0.0
    for i in range(n_classes):
        score = inputs[:, i].astype(jnp.float32)
        t = (target == i).astype(jnp.float32)
        intersect = jnp.sum(score * t)
        y_sum = jnp.sum(t * t)
        z_sum = jnp.sum(score * score)
        loss += 1.0 - (2.0 * intersect + smooth) / (z_sum + y_sum + smooth)
    return loss / n_classes


if __name__ == "__main__":
    key = jax.random.PRNGKey(0)
    k1, k2 = jax.random.split(key)

    n_classes = 2
    N, H, W = 2, 16, 16
    logits = jax.random.normal(k1, (N, n_classes, H, W), dtype=jnp.float32)
    probs = jax.nn.softmax(logits, axis=1)
    target = jax.random.randint(k2, (N, H, W), 0, n_classes, dtype=jnp.int32)
    ref = _dice_loss_ref(probs, target, n_classes)

    # 1) pre-softmaxed f32 probabilities, softmax=False.
    loss = jax.block_until_ready(
        dice_loss(probs, target, n_classes=n_classes, softmax=False))
    assert jnp.allclose(loss, ref, atol=1e-5, rtol=1e-5), (loss, ref)

    # 2) raw f32 logits, softmax fused in kernel (approx reciprocal -> looser).
    loss_sm = jax.block_until_ready(
        dice_loss(logits, target, n_classes=n_classes, softmax=True))
    assert jnp.allclose(loss_sm, ref, atol=5e-3, rtol=5e-3), (loss_sm, ref)

    # 3) narrow storage dtypes on an aligned spatial size: bf16 + int8.
    k3a, k3b = jax.random.split(jax.random.PRNGKey(3))
    lg3 = jax.random.normal(k3a, (2, n_classes, 128, 128), dtype=jnp.float32)
    tg3 = jax.random.randint(k3b, (2, 128, 128), 0, n_classes,
                             dtype=jnp.int32)
    lg3_bf = lg3.astype(jnp.bfloat16)
    ref3 = _dice_loss_ref(
        jax.nn.softmax(lg3_bf.astype(jnp.float32), axis=1), tg3, n_classes)
    loss3 = jax.block_until_ready(
        dice_loss(lg3_bf, tg3.astype(jnp.int8), n_classes=n_classes,
                  softmax=True))
    assert jnp.allclose(loss3, ref3, atol=5e-3, rtol=5e-3), (loss3, ref3)

    # 4) multi-chunk reduction + 2-wide spatial super-chunk split (forced).
    k4a, k4b = jax.random.split(jax.random.PRNGKey(1))
    p4 = jax.nn.softmax(
        jax.random.normal(k4a, (1, n_classes, 64, 64), jnp.float32), axis=1)
    t4 = jax.random.randint(k4b, (1, 64, 64), 0, n_classes, dtype=jnp.int32)
    l4 = jax.block_until_ready(
        dice_loss(p4, t4, n_classes=n_classes, max_rows_per_step=8))
    assert jnp.allclose(l4, _dice_loss_ref(p4, t4, n_classes),
                        atol=1e-5, rtol=1e-5)

    # 5) ragged tail chunk (hwr % tr != 0), masked path on the last block only.
    k5a, k5b = jax.random.split(jax.random.PRNGKey(2))
    p5 = jax.nn.softmax(
        jax.random.normal(k5a, (2, n_classes, 48, 48), jnp.float32), axis=1)
    t5 = jax.random.randint(k5b, (2, 48, 48), 0, n_classes, dtype=jnp.int32)
    l5 = jax.block_until_ready(
        dice_loss(p5, t5, n_classes=n_classes, max_rows_per_step=8))
    assert jnp.allclose(l5, _dice_loss_ref(p5, t5, n_classes),
                        atol=1e-5, rtol=1e-5)

    # 6) large tile -> fori_loop sub-slab path with fused softmax.
    k6a, k6b = jax.random.split(jax.random.PRNGKey(4))
    lg6 = jax.random.normal(k6a, (1, n_classes, 512, 512), jnp.float32)
    t6 = jax.random.randint(k6b, (1, 512, 512), 0, n_classes, dtype=jnp.int32)
    ref6 = _dice_loss_ref(jax.nn.softmax(lg6, axis=1), t6, n_classes)
    l6 = jax.block_until_ready(
        dice_loss(lg6, t6, n_classes=n_classes, softmax=True))
    assert jnp.allclose(l6, ref6, atol=5e-3, rtol=5e-3), (l6, ref6)

    print("KERNEL_OK")
</pallas_src>

<mosaic_0001>
module attributes {stable_mosaic.version = 11 : i64} {
  func.func @kernel(%arg0: i32, %arg1: i32, %arg2: i32, %arg3: memref<1x2x2x128xf32, #tpu.memory_space<vmem>>, %arg4: memref<1x2x128xi32, #tpu.memory_space<vmem>>, %arg5: memref<1x1x6x8x128xf32, #tpu.memory_space<vmem>>) attributes {dimension_semantics = [#tpu.dimension_semantics<parallel>, #tpu.dimension_semantics<parallel>, #tpu.dimension_semantics<arbitrary>], iteration_bounds = array<i64: 2, 1, 1>, scalar_prefetch = 0 : i64, scratch_operands = 0 : i64, tpu.core_type = #tpu.core_type<tc>, window_params = [{transform_indices = @transform_0, window_bounds = array<i64: 1, 2, 2, 128>}, {transform_indices = @transform_1, window_bounds = array<i64: 1, 2, 128>}, {transform_indices = @transform_2, window_bounds = array<i64: 1, 1, 6, 8, 128>}]} {
    %c0_i32 = arith.constant 0 : i32
    %0 = arith.cmpi eq, %arg2, %c0_i32 : i32
    %1 = arith.extui %0 : i1 to i32
    %c0_i32_0 = arith.constant 0 : i32
    %2 = arith.cmpi ne, %1, %c0_i32_0 : i32
    scf.if %2 {
      %cst_84 = arith.constant 0.000000e+00 : f32
      %111 = vector.broadcast %cst_84 : f32 to vector<1x1x6x8x128xf32>
      %c0_85 = arith.constant 0 : index
      %c0_86 = arith.constant 0 : index
      %c0_87 = arith.constant 0 : index
      %c0_88 = arith.constant 0 : index
      %c0_89 = arith.constant 0 : index
      %112 = vector.load %arg5[%c0_85, %c0_86, %c0_87, %c0_88, %c0_89] : memref<1x1x6x8x128xf32, #tpu.memory_space<vmem>>, vector<1x1x6x8x128xf32>
      tpu.vector_store %arg5[%c0_85, %c0_86, %c0_87, %c0_88, %c0_89], %111 {strides = array<i32>} : memref<1x1x6x8x128xf32, #tpu.memory_space<vmem>>, vector<1x1x6x8x128xf32>,
    } else {
    }
    %c0 = arith.constant 0 : index
    %c0_1 = arith.constant 0 : index
    %c0_2 = arith.constant 0 : index
    %3 = vector.load %arg4[%c0, %c0_1, %c0_2] : memref<1x2x128xi32, #tpu.memory_space<vmem>>, vector<1x2x128xi32>
    %4 = vector.shape_cast %3 : vector<1x2x128xi32> to vector<2x128xi32>
    %c0_3 = arith.constant 0 : index
    %c0_4 = arith.constant 0 : index
    %c0_5 = arith.constant 0 : index
    %c0_6 = arith.constant 0 : index
    %5 = vector.load %arg3[%c0_3, %c0_4, %c0_5, %c0_6] : memref<1x2x2x128xf32, #tpu.memory_space<vmem>>, vector<1x1x2x128xf32>
    %6 = vector.shape_cast %5 : vector<1x1x2x128xf32> to vector<2x128xf32>
    %c0_7 = arith.constant 0 : index
    %c1 = arith.constant 1 : index
    %c0_8 = arith.constant 0 : index
    %c0_9 = arith.constant 0 : index
    %7 = vector.load %arg3[%c0_7, %c1, %c0_8, %c0_9] : memref<1x2x2x128xf32, #tpu.memory_space<vmem>>, vector<1x1x2x128xf32>
    %8 = vector.shape_cast %7 : vector<1x1x2x128xf32> to vector<2x128xf32>
    %c0_i32_10 = arith.constant 0 : i32
    %9 = vector.broadcast %c0_i32_10 : i32 to vector<2x128xi32>
    %10 = arith.cmpi eq, %4, %9 : vector<2x128xi32>
    %11 = arith.extui %10 : vector<2x128xi1> to vector<2x128xi32>
    %12 = arith.sitofp %11 : vector<2x128xi32> to vector<2x128xf32>
    %13 = arith.mulf %6, %12 : vector<2x128xf32>
    %cst = arith.constant dense<0.000000e+00> : vector<128xf32>
    %14 = vector.multi_reduction <add>, %13, %cst [0] : vector<2x128xf32> to vector<128xf32>
    %15 = vector.shape_cast %14 : vector<128xf32> to vector<1x128xf32>
    %16 = tpu.iota {dimensions = array<i32: 0>} : vector<8x128xi32>
    %c0_i32_11 = arith.constant 0 : i32
    %17 = vector.broadcast %c0_i32_11 : i32 to vector<8x128xi32>
    %18 = arith.cmpi eq, %16, %17 : vector<8x128xi32>
    %19 = vector.shape_cast %15 : vector<1x128xf32> to vector<1x128xf32>
    %20 = vector.broadcast %19 : vector<1x128xf32> to vector<8x128xf32>
    %cst_12 = arith.constant 0.000000e+00 : f32
    %21 = vector.broadcast %cst_12 : f32 to vector<8x128xf32>
    %22 = arith.select %18, %20, %21 : vector<8x128xi1>, vector<8x128xf32>
    %23 = arith.mulf %6, %6 : vector<2x128xf32>
    %cst_13 = arith.constant dense<0.000000e+00> : vector<128xf32>
    %24 = vector.multi_reduction <add>, %23, %cst_13 [0] : vector<2x128xf32> to vector<128xf32>
    %25 = vector.shape_cast %24 : vector<128xf32> to vector<1x128xf32>
    %26 = tpu.iota {dimensions = array<i32: 0>} : vector<8x128xi32>
    %c0_i32_14 = arith.constant 0 : i32
    %27 = vector.broadcast %c0_i32_14 : i32 to vector<8x128xi32>
    %28 = arith.cmpi eq, %26, %27 : vector<8x128xi32>
    %29 = vector.shape_cast %25 : vector<1x128xf32> to vector<1x128xf32>
    %30 = vector.broadcast %29 : vector<1x128xf32> to vector<8x128xf32>
    %cst_15 = arith.constant 0.000000e+00 : f32
    %31 = vector.broadcast %cst_15 : f32 to vector<8x128xf32>
    %32 = arith.select %28, %30, %31 : vector<8x128xi1>, vector<8x128xf32>
    %cst_16 = arith.constant dense<0.000000e+00> : vector<128xf32>
    %33 = vector.multi_reduction <add>, %12, %cst_16 [0] : vector<2x128xf32> to vector<128xf32>
    %34 = vector.shape_cast %33 : vector<128xf32> to vector<1x128xf32>
    %35 = tpu.iota {dimensions = array<i32: 0>} : vector<8x128xi32>
    %c0_i32_17 = arith.constant 0 : i32
    %36 = vector.broadcast %c0_i32_17 : i32 to vector<8x128xi32>
    %37 = arith.cmpi eq, %35, %36 : vector<8x128xi32>
    %38 = vector.shape_cast %34 : vector<1x128xf32> to vector<1x128xf32>
    %39 = vector.broadcast %38 : vector<1x128xf32> to vector<8x128xf32>
    %cst_18 = arith.constant 0.000000e+00 : f32
    %40 = vector.broadcast %cst_18 : f32 to vector<8x128xf32>
    %41 = arith.select %37, %39, %40 : vector<8x128xi1>, vector<8x128xf32>
    %c1_i32 = arith.constant 1 : i32
    %42 = vector.broadcast %c1_i32 : i32 to vector<2x128xi32>
    %43 = arith.cmpi eq, %4, %42 : vector<2x128xi32>
    %44 = arith.extui %43 : vector<2x128xi1> to vector<2x128xi32>
    %45 = arith.sitofp %44 : vector<2x128xi32> to vector<2x128xf32>
    %46 = arith.mulf %8, %45 : vector<2x128xf32>
    %cst_19 = arith.constant dense<0.000000e+00> : vector<128xf32>
    %47 = vector.multi_reduction <add>, %46, %cst_19 [0] : vector<2x128xf32> to vector<128xf32>
    %48 = vector.shape_cast %47 : vector<128xf32> to vector<1x128xf32>
    %49 = tpu.iota {dimensions = array<i32: 0>} : vector<8x128xi32>
    %c0_i32_20 = arith.constant 0 : i32
    %50 = vector.broadcast %c0_i32_20 : i32 to vector<8x128xi32>
    %51 = arith.cmpi eq, %49, %50 : vector<8x128xi32>
    %52 = vector.shape_cast %48 : vector<1x128xf32> to vector<1x128xf32>
    %53 = vector.broadcast %52 : vector<1x128xf32> to vector<8x128xf32>
    %cst_21 = arith.constant 0.000000e+00 : f32
    %54 = vector.broadcast %cst_21 : f32 to vector<8x128xf32>
    %55 = arith.select %51, %53, %54 : vector<8x128xi1>, vector<8x128xf32>
    %56 = arith.mulf %8, %8 : vector<2x128xf32>
    %cst_22 = arith.constant dense<0.000000e+00> : vector<128xf32>
    %57 = vector.multi_reduction <add>, %56, %cst_22 [0] : vector<2x128xf32> to vector<128xf32>
    %58 = vector.shape_cast %57 : vector<128xf32> to vector<1x128xf32>
    %59 = tpu.iota {dimensions = array<i32: 0>} : vector<8x128xi32>
    %c0_i32_23 = arith.constant 0 : i32
    %60 = vector.broadcast %c0_i32_23 : i32 to vector<8x128xi32>
    %61 = arith.cmpi eq, %59, %60 : vector<8x128xi32>
    %62 = vector.shape_cast %58 : vector<1x128xf32> to vector<1x128xf32>
    %63 = vector.broadcast %62 : vector<1x128xf32> to vector<8x128xf32>
    %cst_24 = arith.constant 0.000000e+00 : f32
    %64 = vector.broadcast %cst_24 : f32 to vector<8x128xf32>
    %65 = arith.select %61, %63, %64 : vector<8x128xi1>, vector<8x128xf32>
    %cst_25 = arith.constant dense<0.000000e+00> : vector<128xf32>
    %66 = vector.multi_reduction <add>, %45, %cst_25 [0] : vector<2x128xf32> to vector<128xf32>
    %67 = vector.shape_cast %66 : vector<128xf32> to vector<1x128xf32>
    %68 = tpu.iota {dimensions = array<i32: 0>} : vector<8x128xi32>
    %c0_i32_26 = arith.constant 0 : i32
    %69 = vector.broadcast %c0_i32_26 : i32 to vector<8x128xi32>
    %70 = arith.cmpi eq, %68, %69 : vector<8x128xi32>
    %71 = vector.shape_cast %67 : vector<1x128xf32> to vector<1x128xf32>
    %72 = vector.broadcast %71 : vector<1x128xf32> to vector<8x128xf32>
    %cst_27 = arith.constant 0.000000e+00 : f32
    %73 = vector.broadcast %cst_27 : f32 to vector<8x128xf32>
    %74 = arith.select %70, %72, %73 : vector<8x128xi1>, vector<8x128xf32>
    %c0_28 = arith.constant 0 : index
    %c0_29 = arith.constant 0 : index
    %c0_30 = arith.constant 0 : index
    %c0_31 = arith.constant 0 : index
    %c0_32 = arith.constant 0 : index
    %75 = vector.load %arg5[%c0_28, %c0_29, %c0_30, %c0_31, %c0_32] : memref<1x1x6x8x128xf32, #tpu.memory_space<vmem>>, vector<1x1x1x8x128xf32>
    %76 = vector.shape_cast %75 : vector<1x1x1x8x128xf32> to vector<8x128xf32>
    %77 = arith.addf %76, %22 : vector<8x128xf32>
    %c0_33 = arith.constant 0 : index
    %c0_34 = arith.constant 0 : index
    %c0_35 = arith.constant 0 : index
    %c0_36 = arith.constant 0 : index
    %c0_37 = arith.constant 0 : index
    %78 = vector.load %arg5[%c0_33, %c0_34, %c0_35, %c0_36, %c0_37] : memref<1x1x6x8x128xf32, #tpu.memory_space<vmem>>, vector<1x1x1x8x128xf32>
    %79 = vector.shape_cast %78 : vector<1x1x1x8x128xf32> to vector<8x128xf32>
    %80 = vector.shape_cast %77 : vector<8x128xf32> to vector<1x1x1x8x128xf32>
    tpu.vector_store %arg5[%c0_33, %c0_34, %c0_35, %c0_36, %c0_37], %80 {strides = array<i32>} : memref<1x1x6x8x128xf32, #tpu.memory_space<vmem>>, vector<1x1x1x8x128xf32>,
    %c0_38 = arith.constant 0 : index
    %c0_39 = arith.constant 0 : index
    %c1_40 = arith.constant 1 : index
    %c0_41 = arith.constant 0 : index
    %c0_42 = arith.constant 0 : index
    %81 = vector.load %arg5[%c0_38, %c0_39, %c1_40, %c0_41, %c0_42] : memref<1x1x6x8x128xf32, #tpu.memory_space<vmem>>, vector<1x1x1x8x128xf32>
    %82 = vector.shape_cast %81 : vector<1x1x1x8x128xf32> to vector<8x128xf32>
    %83 = arith.addf %82, %32 : vector<8x128xf32>
    %c0_43 = arith.constant 0 : index
    %c0_44 = arith.constant 0 : index
    %c1_45 = arith.constant 1 : index
    %c0_46 = arith.constant 0 : index
    %c0_47 = arith.constant 0 : index
    %84 = vector.load %arg5[%c0_43, %c0_44, %c1_45, %c0_46, %c0_47] : memref<1x1x6x8x128xf32, #tpu.memory_space<vmem>>, vector<1x1x1x8x128xf32>
    %85 = vector.shape_cast %84 : vector<1x1x1x8x128xf32> to vector<8x128xf32>
    %86 = vector.shape_cast %83 : vector<8x128xf32> to vector<1x1x1x8x128xf32>
    tpu.vector_store %arg5[%c0_43, %c0_44, %c1_45, %c0_46, %c0_47], %86 {strides = array<i32>} : memref<1x1x6x8x128xf32, #tpu.memory_space<vmem>>, vector<1x1x1x8x128xf32>,
    %c0_48 = arith.constant 0 : index
    %c0_49 = arith.constant 0 : index
    %c2 = arith.constant 2 : index
    %c0_50 = arith.constant 0 : index
    %c0_51 = arith.constant 0 : index
    %87 = vector.load %arg5[%c0_48, %c0_49, %c2, %c0_50, %c0_51] : memref<1x1x6x8x128xf32, #tpu.memory_space<vmem>>, vector<1x1x1x8x128xf32>
    %88 = vector.shape_cast %87 : vector<1x1x1x8x128xf32> to vector<8x128xf32>
    %89 = arith.addf %88, %41 : vector<8x128xf32>
    %c0_52 = arith.constant 0 : index
    %c0_53 = arith.constant 0 : index
    %c2_54 = arith.constant 2 : index
    %c0_55 = arith.constant 0 : index
    %c0_56 = arith.constant 0 : index
    %90 = vector.load %arg5[%c0_52, %c0_53, %c2_54, %c0_55, %c0_56] : memref<1x1x6x8x128xf32, #tpu.memory_space<vmem>>, vector<1x1x1x8x128xf32>
    %91 = vector.shape_cast %90 : vector<1x1x1x8x128xf32> to vector<8x128xf32>
    %92 = vector.shape_cast %89 : vector<8x128xf32> to vector<1x1x1x8x128xf32>
    tpu.vector_store %arg5[%c0_52, %c0_53, %c2_54, %c0_55, %c0_56], %92 {strides = array<i32>} : memref<1x1x6x8x128xf32, #tpu.memory_space<vmem>>, vector<1x1x1x8x128xf32>,
    %c0_57 = arith.constant 0 : index
    %c0_58 = arith.constant 0 : index
    %c3 = arith.constant 3 : index
    %c0_59 = arith.constant 0 : index
    %c0_60 = arith.constant 0 : index
    %93 = vector.load %arg5[%c0_57, %c0_58, %c3, %c0_59, %c0_60] : memref<1x1x6x8x128xf32, #tpu.memory_space<vmem>>, vector<1x1x1x8x128xf32>
    %94 = vector.shape_cast %93 : vector<1x1x1x8x128xf32> to vector<8x128xf32>
    %95 = arith.addf %94, %55 : vector<8x128xf32>
    %c0_61 = arith.constant 0 : index
    %c0_62 = arith.constant 0 : index
    %c3_63 = arith.constant 3 : index
    %c0_64 = arith.constant 0 : index
    %c0_65 = arith.constant 0 : index
    %96 = vector.load %arg5[%c0_61, %c0_62, %c3_63, %c0_64, %c0_65] : memref<1x1x6x8x128xf32, #tpu.memory_space<vmem>>, vector<1x1x1x8x128xf32>
    %97 = vector.shape_cast %96 : vector<1x1x1x8x128xf32> to vector<8x128xf32>
    %98 = vector.shape_cast %95 : vector<8x128xf32> to vector<1x1x1x8x128xf32>
    tpu.vector_store %arg5[%c0_61, %c0_62, %c3_63, %c0_64, %c0_65], %98 {strides = array<i32>} : memref<1x1x6x8x128xf32, #tpu.memory_space<vmem>>, vector<1x1x1x8x128xf32>,
    %c0_66 = arith.constant 0 : index
    %c0_67 = arith.constant 0 : index
    %c4 = arith.constant 4 : index
    %c0_68 = arith.constant 0 : index
    %c0_69 = arith.constant 0 : index
    %99 = vector.load %arg5[%c0_66, %c0_67, %c4, %c0_68, %c0_69] : memref<1x1x6x8x128xf32, #tpu.memory_space<vmem>>, vector<1x1x1x8x128xf32>
    %100 = vector.shape_cast %99 : vector<1x1x1x8x128xf32> to vector<8x128xf32>
    %101 = arith.addf %100, %65 : vector<8x128xf32>
    %c0_70 = arith.constant 0 : index
    %c0_71 = arith.constant 0 : index
    %c4_72 = arith.constant 4 : index
    %c0_73 = arith.constant 0 : index
    %c0_74 = arith.constant 0 : index
    %102 = vector.load %arg5[%c0_70, %c0_71, %c4_72, %c0_73, %c0_74] : memref<1x1x6x8x128xf32, #tpu.memory_space<vmem>>, vector<1x1x1x8x128xf32>
    %103 = vector.shape_cast %102 : vector<1x1x1x8x128xf32> to vector<8x128xf32>
    %104 = vector.shape_cast %101 : vector<8x128xf32> to vector<1x1x1x8x128xf32>
    tpu.vector_store %arg5[%c0_70, %c0_71, %c4_72, %c0_73, %c0_74], %104 {strides = array<i32>} : memref<1x1x6x8x128xf32, #tpu.memory_space<vmem>>, vector<1x1x1x8x128xf32>,
    %c0_75 = arith.constant 0 : index
    %c0_76 = arith.constant 0 : index
    %c5 = arith.constant 5 : index
    %c0_77 = arith.constant 0 : index
    %c0_78 = arith.constant 0 : index
    %105 = vector.load %arg5[%c0_75, %c0_76, %c5, %c0_77, %c0_78] : memref<1x1x6x8x128xf32, #tpu.memory_space<vmem>>, vector<1x1x1x8x128xf32>
    %106 = vector.shape_cast %105 : vector<1x1x1x8x128xf32> to vector<8x128xf32>
    %107 = arith.addf %106, %74 : vector<8x128xf32>
    %c0_79 = arith.constant 0 : index
    %c0_80 = arith.constant 0 : index
    %c5_81 = arith.constant 5 : index
    %c0_82 = arith.constant 0 : index
    %c0_83 = arith.constant 0 : index
    %108 = vector.load %arg5[%c0_79, %c0_80, %c5_81, %c0_82, %c0_83] : memref<1x1x6x8x128xf32, #tpu.memory_space<vmem>>, vector<1x1x1x8x128xf32>
    %109 = vector.shape_cast %108 : vector<1x1x1x8x128xf32> to vector<8x128xf32>
    %110 = vector.shape_cast %107 : vector<8x128xf32> to vector<1x1x1x8x128xf32>
    tpu.vector_store %arg5[%c0_79, %c0_80, %c5_81, %c0_82, %c0_83], %110 {strides = array<i32>} : memref<1x1x6x8x128xf32, #tpu.memory_space<vmem>>, vector<1x1x1x8x128xf32>,
    return
  }
  func.func @transform_0(%arg0: i32, %arg1: i32, %arg2: i32) -> (i32, i32, i32, i32) {
    %c1_i32 = arith.constant 1 : i32
    %0 = arith.muli %arg1, %c1_i32 : i32
    %1 = arith.addi %0, %arg2 : i32
    %c0_i32 = arith.constant 0 : i32
    %c0_i32_0 = arith.constant 0 : i32
    %c0_i32_1 = arith.constant 0 : i32
    return %arg0, %c0_i32, %1, %c0_i32_0 : i32, i32, i32, i32
  }
  func.func @transform_1(%arg0: i32, %arg1: i32, %arg2: i32) -> (i32, i32, i32) {
    %c1_i32 = arith.constant 1 : i32
    %0 = arith.muli %arg1, %c1_i32 : i32
    %1 = arith.addi %0, %arg2 : i32
    %c0_i32 = arith.constant 0 : i32
    %c0_i32_0 = arith.constant 0 : i32
    return %arg0, %1, %c0_i32 : i32, i32, i32
  }
  func.func @transform_2(%arg0: i32, %arg1: i32, %arg2: i32) -> (i32, i32, i32, i32, i32) {
    %c0_i32 = arith.constant 0 : i32
    %c0_i32_0 = arith.constant 0 : i32
    %c0_i32_1 = arith.constant 0 : i32
    %c0_i32_2 = arith.constant 0 : i32
    return %arg0, %arg1, %c0_i32, %c0_i32_0, %c0_i32_1 : i32, i32, i32, i32, i32
  }
}

</mosaic_0001>

<llo_original>
// kernel: dice_loss.1
$region0: #{dice_loss.1}
  #allocation0 [shape = 'u32[]', space=smem, size = 0x4, offset = 0x4, fixed_abs, tag = 'smem constant byte address 0x4 - core index']
  #allocation1 [shape = 'u32[144,128]{1,0:T(1,128)}', space=vmem, size = 0x12000, scoped, tag = 'internal scratch']
  %s0 = inlined_call_operand.vmem [shape: f32[2,2,2,128], index: 0, kind: input, shape index: {}]
  %s1 = inlined_call_operand.vmem [shape: s32[2,2,128], index: 1, kind: input, shape index: {}]
  %s2 = inlined_call_operand.vmem [shape: f32[2,1,6,8,128], index: 2, kind: output, shape index: {}]
  %s3 = sld [smem:[#allocation0]]
  $region45: #{dice_loss.1} parent=0
    _
  %s5 = ssub.s32 1, %s3
  %s6 = scalar_select 0, %s5, %s3
  loop: start=0, step=1, limit=4
  $region2: #{dice_loss.1} parent=0 // loop_pre_header
    _
  $region3: #{dice_loss.1} parent=0 // loop_header
    %s8 = sphi 0, %s12
    %p9 = scmp.ge.s32.totalorder %s8, 4
    %s15 = sphi 0, %s34
    %s16 = sphi 0, %s30
    %s17 = sphi 0, %s26
    %s18 = sphi 0, %s15
    %s19 = sphi 0, %s16
    %s20 = sphi 0, %s17
    %s21 = sphi 0, %s18
    %s22 = sphi 0, %s19
    %s23 = sphi 0, %s20
    %s41 = sphi 0, %s43
    %s44 = sphi 0, %s41
    %s45 = sphi 0, %s44
    %s61 = sphi 0, %s45
    %s71 = sphi 0, %s73
    %s74 = sphi 0, %s71
    %s75 = sphi 0, %s74
    %s91 = sphi 0, %s75
    %s99 = sphi 0, %s101
    %s102 = sphi 0, %s99
    %s103 = sphi 0, %s102
    %s119 = sphi 0, %s103
  $region4: #{dice_loss.1} parent=0 // loop_header_branch
    %11 = sbr.rel (%p9) target = $region8
  $region5: #{dice_loss.1} parent=0 // loop_body
    %s13 = ssub.s32 %s8, 1
    %s14 = ssub.s32 %s8, 2
    %s24 = sadd.s32 1, %s17
    %p25 = scmp.ge.s32.totalorder %s24, 1
    %s26 = scalar_select %p25, 0, %s24
    %s27 = sadd.s32 1, %s16
    %s28 = scalar_select %p25, %s27, %s16
    %p29 = scmp.ge.s32.totalorder %s28, 1
    %s30 = scalar_select %p29, 0, %s28
    %s31 = sadd.s32 1, %s15
    %s32 = scalar_select %p29, %s31, %s15
    %p33 = scmp.ge.s32.totalorder %s32, 2
    %s34 = scalar_select %p33, 0, %s32
    %s35 = sadd.s32 %s16, %s17
    %s36 = sadd.s32 %s30, %s26
    %s37 = ssub.s32 %s15, %s34
    %s38 = ssub.s32 %s35, %s36
    %s39 = sor.u32 %s37, %s38
    %p40 = scmp.eq.s32.totalorder %s39, 0
    %s42 = sadd.s32 %s41, 1
    %s43 = scalar_select %p40, %s41, %s42
    %p46 = pneg %p40
    %p47 = scmp.eq.s32.totalorder %s8, 1
    %p48 = por %p46, %p47
    %p49 = scmp.ne.s32.totalorder %s41, %s44
    %p50 = scmp.eq.s32.totalorder %s8, 0
    %p51 = por %p49, %p50
    %p52 = scmp.ne.s32.totalorder %s41, %s44
    %p53 = scmp.eq.s32.totalorder %s13, 1
    %p54 = por %p52, %p53
    %p55 = scmp.ne.s32.totalorder %s44, %s45
    %p56 = scmp.eq.s32.totalorder %s13, 0
    %p57 = por %p55, %p56
    %p58 = scmp.ne.s32.totalorder %s44, %s45
    %p59 = scmp.eq.s32.totalorder %s14, 1
    %p60 = por %p58, %p59
    %p62 = scmp.ne.s32.totalorder %s45, %s61
    %p63 = scmp.eq.s32.totalorder %s14, 0
    %p64 = por %p62, %p63
    %s65 = sadd.s32 %s16, %s17
    %s66 = sadd.s32 %s30, %s26
    %s67 = ssub.s32 %s15, %s34
    %s68 = ssub.s32 %s65, %s66
    %s69 = sor.u32 %s67, %s68
    %p70 = scmp.eq.s32.totalorder %s69, 0
    %s72 = sadd.s32 %s71, 1
    %s73 = scalar_select %p70, %s71, %s72
    %p76 = pneg %p70
    %p77 = scmp.eq.s32.totalorder %s8, 1
    %p78 = por %p76, %p77
    %p79 = scmp.ne.s32.totalorder %s71, %s74
    %p80 = scmp.eq.s32.totalorder %s8, 0
    %p81 = por %p79, %p80
    %p82 = scmp.ne.s32.totalorder %s71, %s74
    %p83 = scmp.eq.s32.totalorder %s13, 1
    %p84 = por %p82, %p83
    %p85 = scmp.ne.s32.totalorder %s74, %s75
    %p86 = scmp.eq.s32.totalorder %s13, 0
    %p87 = por %p85, %p86
    %p88 = scmp.ne.s32.totalorder %s74, %s75
    %p89 = scmp.eq.s32.totalorder %s14, 1
    %p90 = por %p88, %p89
    %p92 = scmp.ne.s32.totalorder %s75, %s91
    %p93 = scmp.eq.s32.totalorder %s14, 0
    %p94 = por %p92, %p93
    %s95 = ssub.s32 %s15, %s34
    %s96 = ssub.s32 %s16, %s30
    %s97 = sor.u32 %s95, %s96
    %p98 = scmp.eq.s32.totalorder %s97, 0
    %s100 = sadd.s32 %s99, 1
    %s101 = scalar_select %p98, %s99, %s100
    %p104 = pneg %p98
    %p105 = scmp.eq.s32.totalorder %s8, 1
    %p106 = por %p104, %p105
    %p107 = scmp.ne.s32.totalorder %s99, %s102
    %p108 = scmp.eq.s32.totalorder %s8, 0
    %p109 = por %p107, %p108
    %p110 = scmp.ne.s32.totalorder %s99, %s102
    %p111 = scmp.eq.s32.totalorder %s13, 1
    %p112 = por %p110, %p111
    %p113 = scmp.ne.s32.totalorder %s102, %s103
    %p114 = scmp.eq.s32.totalorder %s13, 0
    %p115 = por %p113, %p114
    %p116 = scmp.ne.s32.totalorder %s102, %s103
    %p117 = scmp.eq.s32.totalorder %s14, 1
    %p118 = por %p116, %p117
    %p120 = scmp.ne.s32.totalorder %s103, %s119
    %p121 = scmp.eq.s32.totalorder %s14, 0
    %p122 = por %p120, %p121
    %p123 = scmp.le.s32.totalorder 1, %s8
    %p124 = scmp.lt.s32.totalorder %s8, 3
    %p125 = pnand %p123, %p124
    %p126 = pneg %p125
    // Predicated region
    $region9: #{dice_loss.1} parent=5 // pred_check
      _
    $region10: #{dice_loss.1} parent=5 // pred_check_branch
      %128 = sbr.rel (%p125) target = $region12
    $region11: #{dice_loss.1} parent=5 // pred_region
      %s129 = ssub.s32 %s8, 1
    $region12: #{dice_loss.1} parent=5 // pred_fallthru
      _
    %p130 = scmp.lt.s32.totalorder %s8, 2
    // Predicated region
    $region13: #{dice_loss.1} parent=5 // pred_check
      %p131 = pneg %p130
    $region14: #{dice_loss.1} parent=5 // pred_check_branch
      %133 = sbr.rel (%p131) target = $region16
    $region15: #{dice_loss.1} parent=5 // pred_region
      // Predicated region
      $region17: #{dice_loss.1} parent=15 // pred_check
        %p134 = pneg %p51
      $region18: #{dice_loss.1} parent=15 // pred_check_branch
        %136 = sbr.rel (%p134) target = $region20
      $region19: #{dice_loss.1} parent=15 // pred_region
        %s137 = sadd.s32 %s16, %s17
        %p138 = scmp.lt.s32.totalorder %s15, 1
        %s139 = scalar_select %p138, %s15, 1
        %p140 = scmp.lt.s32.totalorder %s137, 0
        %s141 = scalar_select %p140, %s137, 0
        %s142 = smul.addr %s139, 2
        %s143 = sadd.s32 %s141, %s142
        %s144 = smul.addr %s143, 2
        %s145 = scalar_lea.vmem %s0, %s144
        %s146 = sadd.s32 %s16, %s17
      $region20: #{dice_loss.1} parent=15 // pred_fallthru
        _
      // Predicated region
      $region21: #{dice_loss.1} parent=15 // pred_check
        %p147 = pneg %p81
      $region22: #{dice_loss.1} parent=15 // pred_check_branch
        %149 = sbr.rel (%p147) target = $region24
      $region23: #{dice_loss.1} parent=15 // pred_region
        %s150 = sadd.s32 %s16, %s17
        %p151 = scmp.lt.s32.totalorder %s15, 1
        %s152 = scalar_select %p151, %s15, 1
        %p153 = scmp.lt.s32.totalorder %s150, 0
        %s154 = scalar_select %p153, %s150, 0
        %s155 = sadd.s32 %s154, %s152
        %s156 = smul.addr %s155, 2
        %s157 = scalar_lea.vmem %s1, %s156
        %s158 = sadd.s32 %s16, %s17
      $region24: #{dice_loss.1} parent=15 // pred_fallthru
        _
    $region16: #{dice_loss.1} parent=5 // pred_fallthru
      _
    %p159 = scmp.le.s32.totalorder 1, %s8
    %p160 = scmp.lt.s32.totalorder %s8, 3
    %p161 = pnand %p159, %p160
    %p162 = pneg %p161
    // Predicated region
    $region25: #{dice_loss.1} parent=5 // pred_check
      _
    $region26: #{dice_loss.1} parent=5 // pred_check_branch
      %164 = sbr.rel (%p161) target = $region28
    $region27: #{dice_loss.1} parent=5 // pred_region
      %s165 = ssub.s32 %s8, 1
      %s166 = sadd.s32 %s19, %s20
      %p167 = scmp.lt.s32.totalorder %s18, 1
      %s168 = scalar_select %p167, %s18, 1
      %p169 = scmp.lt.s32.totalorder %s166, 0
      %s170 = scalar_select %p169, %s166, 0
      %s171 = smul.addr %s168, 2
      %s172 = sadd.s32 %s170, %s171
      %s173 = smul.addr %s172, 2
      %s174 = scalar_lea.vmem %s0, %s173
      %p175 = pneg %p57
      %p176 = pneg %p54
      %s177 = sadd.s32 %s19, %s20
      %p178 = scmp.lt.s32.totalorder %s18, 1
      %s179 = scalar_select %p178, %s18, 1
      %p180 = scmp.lt.s32.totalorder %s177, 0
      %s181 = scalar_select %p180, %s177, 0
      %s182 = sadd.s32 %s181, %s179
      %s183 = smul.addr %s182, 2
      %s184 = scalar_lea.vmem %s1, %s183
      %p185 = pneg %p87
      %p186 = pneg %p84
      %p187 = pneg %p115
      %p188 = pneg %p112
      %p189 = scmp.lt.s32.totalorder %s18, 1
      %s190 = scalar_select %p189, %s18, 1
      %p191 = scmp.lt.s32.totalorder %s19, 0
      %s192 = scalar_select %p191, %s19, 0
      %s193 = smul.addr %s192, 6
      %s194 = smul.addr %s190, 6
      %s195 = sadd.s32 %s193, %s194
      %s196 = smul.addr %s195, 8
      %s197 = scalar_lea.vmem %s2, %s196
      %s198 = sadd.s32 %s19, %s20
      %p199 = scmp.lt.s32.totalorder %s18, 1
      %s200 = scalar_select %p199, %s18, 1
      %p201 = scmp.lt.s32.totalorder %s198, 0
      %s202 = scalar_select %p201, %s198, 0
      %s203 = smul.addr %s200, 2
      %s204 = sadd.s32 %s202, %s203
      %s205 = smul.addr %s204, 2
      %s206 = scalar_lea.vmem %s0, %s205
      %s207 = sadd.s32 %s19, %s20
      %s208 = sadd.s32 %s19, %s20
      %p209 = scmp.lt.s32.totalorder %s18, 1
      %s210 = scalar_select %p209, %s18, 1
      %p211 = scmp.lt.s32.totalorder %s208, 0
      %s212 = scalar_select %p211, %s208, 0
      %s213 = sadd.s32 %s212, %s210
      %s214 = smul.addr %s213, 2
      %s215 = scalar_lea.vmem %s1, %s214
      %s216 = sadd.s32 %s19, %s20
      %p217 = scmp.lt.s32.totalorder %s18, 1
      %s218 = scalar_select %p217, %s18, 1
      %p219 = scmp.lt.s32.totalorder %s19, 0
      %s220 = scalar_select %p219, %s19, 0
      %s221 = smul.addr %s220, 6
      %s222 = smul.addr %s218, 6
      %s223 = sadd.s32 %s221, %s222
      %s224 = smul.addr %s223, 8
      %s225 = scalar_lea.vmem %s2, %s224
      %p226 = scmp.eq.s32.totalorder %s20, 0
      // Predicated region
      $region29: #{dice_loss.1} parent=27 // pred_check
        %p227 = pneg %p226
      $region30: #{dice_loss.1} parent=27 // pred_check_branch
        %229 = sbr.rel (%p227) target = $region32
      $region31: #{dice_loss.1} parent=27 // pred_region
        %230 = vst [vmem:[%s225] sm:$0xff] 0.0
        %231 = vst [vmem:[%s225 + $0x8] sm:$0xff] 0.0
        %232 = vst [vmem:[%s225 + $0x10] sm:$0xff] 0.0
        %233 = vst [vmem:[%s225 + $0x18] sm:$0xff] 0.0
        %234 = vst [vmem:[%s225 + $0x20] sm:$0xff] 0.0
        %235 = vst [vmem:[%s225 + $0x28] sm:$0xff] 0.0
      $region32: #{dice_loss.1} parent=27 // pred_fallthru
        _
      %v236 = vld [vmem:[%s215] sm:$0x3]
      %v237 = vld [vmem:[%s206] sm:$0x3]
      %s238 = scalar_lea.vmem %s206, 2
      %v239 = vld [vmem:[%s238] sm:$0x3]
      %vm240 = vcmp.eq.s32.totalorder %v236, 0
      %v241 = vsel %vm240, 1, 0
      %v242 = vcvt.s32.f32 %v241
      %v243 = vmul.f32 %v237, %v242
      %vm244 = vcmask 1041408
      %v245 = vsel %vm244, %v243, 0.0
      %v246 = vrot.slane %v245, 4
      %v247 = vadd.f32 %v245, %v246
      %v248 = vrot.slane %v247, 2
      %v249 = vadd.f32 %v247, %v248
      %v250 = vrot.slane %v249, 1
      %v251 = vadd.f32 %v249, %v250
      %v252 = vlaneseq
      %v253 = vshrl.u32 %v252, 7
      %vm254 = vcmp.eq.s32.totalorder %v253, 0
      %v255 = vsel %vm254, %v251, 0.0
      %v256 = vmul.f32 %v237, %v237
      %v257 = vsel %vm244, %v256, 0.0
      %v258 = vrot.slane %v257, 4
      %v259 = vadd.f32 %v257, %v258
      %v260 = vrot.slane %v259, 2
      %v261 = vadd.f32 %v259, %v260
      %v262 = vrot.slane %v261, 1
      %v263 = vadd.f32 %v261, %v262
      %v264 = vsel %vm254, %v263, 0.0
      %v265 = vsel %vm244, %v242, 0.0
      %v266 = vrot.slane %v265, 4
      %v267 = vadd.f32 %v265, %v266
      %v268 = vrot.slane %v267, 2
      %v269 = vadd.f32 %v267, %v268
      %v270 = vrot.slane %v269, 1
      %v271 = vadd.f32 %v269, %v270
      %v272 = vsel %vm254, %v271, 0.0
      %vm273 = vcmp.eq.s32.totalorder %v236, 1
      %v274 = vsel %vm273, 1, 0
      %v275 = vcvt.s32.f32 %v274
      %v276 = vmul.f32 %v239, %v275
      %v277 = vsel %vm244, %v276, 0.0
      %v278 = vrot.slane %v277, 4
      %v279 = vadd.f32 %v277, %v278
      %v280 = vrot.slane %v279, 2
      %v281 = vadd.f32 %v279, %v280
      %v282 = vrot.slane %v281, 1
      %v283 = vadd.f32 %v281, %v282
      %v284 = vsel %vm254, %v283, 0.0
      %v285 = vmul.f32 %v239, %v239
      %v286 = vsel %vm244, %v285, 0.0
      %v287 = vrot.slane %v286, 4
      %v288 = vadd.f32 %v286, %v287
      %v289 = vrot.slane %v288, 2
      %v290 = vadd.f32 %v288, %v289
      %v291 = vrot.slane %v290, 1
      %v292 = vadd.f32 %v290, %v291
      %v293 = vsel %vm254, %v292, 0.0
      %v294 = vsel %vm244, %v275, 0.0
      %v295 = vrot.slane %v294, 4
      %v296 = vadd.f32 %v294, %v295
      %v297 = vrot.slane %v296, 2
      %v298 = vadd.f32 %v296, %v297
      %v299 = vrot.slane %v298, 1
      %v300 = vadd.f32 %v298, %v299
      %v301 = vsel %vm254, %v300, 0.0
      %v302 = vld [vmem:[%s225] sm:$0xff]
      %v303 = vadd.f32 %v302, %v255
      %304 = vst [vmem:[%s225] sm:$0xff] %v303
      %s305 = scalar_lea.vmem %s225, 8
      %v306 = vld [vmem:[%s305] sm:$0xff]
      %v307 = vadd.f32 %v306, %v264
      %308 = vst [vmem:[%s305] sm:$0xff] %v307
      %s309 = scalar_lea.vmem %s225, 16
      %v310 = vld [vmem:[%s309] sm:$0xff]
      %v311 = vadd.f32 %v310, %v272
      %312 = vst [vmem:[%s309] sm:$0xff] %v311
      %s313 = scalar_lea.vmem %s225, 24
      %v314 = vld [vmem:[%s313] sm:$0xff]
      %v315 = vadd.f32 %v314, %v284
      %316 = vst [vmem:[%s313] sm:$0xff] %v315
      %s317 = scalar_lea.vmem %s225, 32
      %v318 = vld [vmem:[%s317] sm:$0xff]
      %v319 = vadd.f32 %v318, %v293
      %320 = vst [vmem:[%s317] sm:$0xff] %v319
      %s321 = scalar_lea.vmem %s225, 40
      %v322 = vld [vmem:[%s321] sm:$0xff]
      %v323 = vadd.f32 %v322, %v301
      %324 = vst [vmem:[%s321] sm:$0xff] %v323
      %p325 = scmp.lt.s32.totalorder %s18, 1
      %s326 = scalar_select %p325, %s18, 1
      %p327 = scmp.lt.s32.totalorder %s19, 0
      %s328 = scalar_select %p327, %s19, 0
      %s329 = smul.addr %s328, 6
      %s330 = smul.addr %s326, 6
      %s331 = sadd.s32 %s329, %s330
      %s332 = smul.addr %s331, 8
      %s333 = scalar_lea.vmem %s2, %s332
      // Predicated region
      $region33: #{dice_loss.1} parent=27 // pred_check
        %p334 = pneg %p112
      $region34: #{dice_loss.1} parent=27 // pred_check_branch
        %336 = sbr.rel (%p334) target = $region36
      $region35: #{dice_loss.1} parent=27 // pred_region
        _
      $region36: #{dice_loss.1} parent=27 // pred_fallthru
        _
    $region28: #{dice_loss.1} parent=5 // pred_fallthru
      _
    %p337 = scmp.le.s32.totalorder 2, %s8
    // Predicated region
    $region37: #{dice_loss.1} parent=5 // pred_check
      %p338 = pneg %p337
    $region38: #{dice_loss.1} parent=5 // pred_check_branch
      %340 = sbr.rel (%p338) target = $region40
    $region39: #{dice_loss.1} parent=5 // pred_region
      %s341 = ssub.s32 %s8, 2
      // Predicated region
      $region41: #{dice_loss.1} parent=39 // pred_check
        %p342 = pneg %p118
      $region42: #{dice_loss.1} parent=39 // pred_check_branch
        %344 = sbr.rel (%p342) target = $region44
      $region43: #{dice_loss.1} parent=39 // pred_region
        %p345 = scmp.lt.s32.totalorder %s21, 1
        %s346 = scalar_select %p345, %s21, 1
        %p347 = scmp.lt.s32.totalorder %s22, 0
        %s348 = scalar_select %p347, %s22, 0
        %s349 = smul.addr %s348, 6
        %s350 = smul.addr %s346, 6
        %s351 = sadd.s32 %s349, %s350
        %s352 = smul.addr %s351, 8
        %s353 = scalar_lea.vmem %s2, %s352
      $region44: #{dice_loss.1} parent=39 // pred_fallthru
        _
    $region40: #{dice_loss.1} parent=5 // pred_fallthru
      _
  $region6: #{dice_loss.1} parent=0 // loop_footer
    %s12 = sadd.s32 1, %s8
  $region7: #{dice_loss.1} parent=0 // loop_footer_branch
    %7 = sbr.rel target = $region3
  $region8: #{dice_loss.1} parent=0 // loop_exit
    _

</llo_original>
